<compile_context>
chip_gen: v6e
topology: v6e:2x2x1
jax: 0.10.0
libtpu: 0.0.40
codegen_flags: <defaults>
</compile_context>

<pallas_src>
import jax
import jax.numpy as jnp
from jax.experimental import pallas as pl
from jax.experimental.pallas import tpu as pltpu

_LANES = 128


def _round_up(x, m):
    return (x + m - 1) // m * m


def _slab_layout(n_in):
    """Row offsets of each parameter segment inside the packed (ROWS, 128) slab."""
    r_w1 = 0
    r_b1 = r_w1 + _round_up(max(n_in, 1), 8)
    r_w2 = r_b1 + 8
    r_b2 = r_w2 + _LANES          # w2 zero-padded to 128 rows (matches 128-lane h1)
    r_wh = r_b2 + 8
    r_bh = r_wh + _LANES          # fused head weight zero-padded to 128 rows
    rows = r_bh + 8
    return (r_w1, r_b1, r_w2, r_b2, r_wh, r_bh), rows


def pack_params(params, n_in, n_mid, n_out):
    """Fold the dueling head into one linear layer and pack everything into a
    single (ROWS, 128) f32 slab (zero-padded), DMA'd once per kernel call."""
    assert n_in <= _LANES and n_mid <= _LANES and n_out <= _LANES
    w1, b1 = params["w1"], params["b1"]
    w2, b2 = params["w2"], params["b2"]
    wa, ba = params["wa"], params["ba"]
    wv, bv = params["wv"], params["bv"]

    # Exact algebra: out = V + A - mean(A) is linear in the head parameters.
    w_head = wv + wa - jnp.mean(wa, axis=1, keepdims=True)      # (n_mid, n_out)
    b_head = bv + ba - jnp.mean(ba, axis=1, keepdims=True)      # (1, n_out)

    (r_w1, r_b1, r_w2, r_b2, r_wh, r_bh), rows = _slab_layout(n_in)
    slab = jnp.zeros((rows, _LANES), jnp.float32)
    slab = slab.at[r_w1:r_w1 + n_in, :n_mid].set(w1.astype(jnp.float32))
    slab = slab.at[r_b1, :n_mid].set(b1.reshape(-1).astype(jnp.float32))
    slab = slab.at[r_w2:r_w2 + n_mid, :n_mid].set(w2.astype(jnp.float32))
    slab = slab.at[r_b2, :n_mid].set(b2.reshape(-1).astype(jnp.float32))
    slab = slab.at[r_wh:r_wh + n_mid, :n_out].set(w_head.astype(jnp.float32))
    slab = slab.at[r_bh, :n_out].set(b_head.reshape(-1).astype(jnp.float32))
    return slab


def _make_kernel(n_in, offs):
    r_w1, r_b1, r_w2, r_b2, r_wh, r_bh = offs

    def kernel(x_ref, p_ref, out_ref):
        x = x_ref[...]                                            # (TB, n_in)
        # fc1 on the VPU: K = n_in is tiny, so an unrolled chain of broadcast
        # multiply-adds is cheaper than an MXU push -> result-FIFO round trip.
        h1 = p_ref[r_b1:r_b1 + 1, :]                              # (1, 128) bias
        for j in range(n_in):                                     # static unroll
            h1 = h1 + x[:, j:j + 1] * p_ref[r_w1 + j:r_w1 + j + 1, :]
        h1 = jnp.maximum(h1, 0.0)                                 # (TB, 128)
        # fc2 + relu on the MXU (weights zero-padded -> padded lanes stay 0).
        h2 = jnp.dot(h1, p_ref[r_w2:r_w2 + _LANES, :],
                     preferred_element_type=jnp.float32)
        h2 = jnp.maximum(h2 + p_ref[r_b2:r_b2 + 1, :], 0.0)       # (TB, 128)
        # Fused dueling head: V + A - mean(A) folded into one linear at pack time.
        out = jnp.dot(h2, p_ref[r_wh:r_wh + _LANES, :],
                      preferred_element_type=jnp.float32)
        # Lane-dense store: write the full 128-wide slab; wrapper slices n_out.
        out_ref[...] = (out + p_ref[r_bh:r_bh + 1, :]).astype(out_ref.dtype)

    return kernel


def _pick_block_b(B):
    """Batch tile: 1 step up to 256 rows; for bigger batches, an even number
    of <=256-row 'parallel' steps so v7x megacore can split across both TCs."""
    if B <= 256:
        return B                       # single grid step (block == full dim)
    half = B // 2
    if B % 2 == 0 and half <= 256 and half % 8 == 0:
        return half                    # exactly 2 parallel steps
    return 256                         # fall back to 256-row tiles (+padding)


def dueling_net_forward(x, slab, n_out, *, block_b=None):
    """x: (B, n_in) f32, slab: packed params from pack_params. Returns (B, n_out)."""
    B, n_in = x.shape
    offs, rows = _slab_layout(n_in)
    assert slab.shape == (rows, _LANES), (slab.shape, rows)

    if block_b is None:
        block_b = _pick_block_b(B)
    # Pad ragged batches (e.g. last replay-buffer minibatch) instead of asserting.
    B_pad = _round_up(B, block_b)
    x_p = x if B_pad == B else jnp.pad(x, ((0, B_pad - B), (0, 0)))
    grid = (B_pad // block_b,)

    kernel = _make_kernel(n_in, offs)
    flops = 2 * B_pad * (n_in * _LANES + 2 * _LANES * _LANES)
    bytes_accessed = 4 * (B_pad * n_in + rows * _LANES + B_pad * _LANES)

    out = pl.pallas_call(
        kernel,
        out_shape=jax.ShapeDtypeStruct((B_pad, _LANES), jnp.float32),
        grid_spec=pltpu.PrefetchScalarGridSpec(
            num_scalar_prefetch=0,
            grid=grid,
            in_specs=[
                # Batch tile of activations.
                pl.BlockSpec((block_b, n_in), lambda i: (i, 0)),
                # Packed params: full array in VMEM, single buffer, single DMA,
                # resident across all batch tiles (no pipelining needed).
                pl.BlockSpec(memory_space=pltpu.MemorySpace.VMEM),
            ],
            # Lane-dense output (full 128 lanes) -> unmasked stores + dense DMA.
            out_specs=pl.BlockSpec((block_b, _LANES), lambda i: (i, 0)),
        ),
        compiler_params=pltpu.CompilerParams(
            dimension_semantics=("parallel",)),
        cost_estimate=pl.CostEstimate(
            flops=flops, transcendentals=0, bytes_accessed=bytes_accessed),
    )(x_p, slab)
    return out[:B, :n_out]


def init_params(key, n_in, n_mid, n_out):
    """Deterministic PyTorch-style Linear init: U(-1/sqrt(fan_in), 1/sqrt(fan_in)).
    Weights stored as (in_features, out_features); biases as (1, out_features)."""
    def linear(k, fan_in, fan_out):
        kw, kb = jax.random.split(k)
        bound = 1.0 / jnp.sqrt(jnp.float32(fan_in))
        w = jax.random.uniform(kw, (fan_in, fan_out), jnp.float32, -bound, bound)
        b = jax.random.uniform(kb, (1, fan_out), jnp.float32, -bound, bound)
        return w, b

    k1, k2, k3, k4 = jax.random.split(key, 4)
    w1, b1 = linear(k1, n_in, n_mid)
    w2, b2 = linear(k2, n_mid, n_mid)
    wa, ba = linear(k3, n_mid, n_out)
    wv, bv = linear(k4, n_mid, 1)
    return dict(w1=w1, b1=b1, w2=w2, b2=b2, wa=wa, ba=ba, wv=wv, bv=bv)


def reference_forward(x, p):
    """Pure-JAX reference matching the PyTorch module exactly."""
    h1 = jax.nn.relu(x @ p["w1"] + p["b1"])
    h2 = jax.nn.relu(h1 @ p["w2"] + p["b2"])
    adv = h2 @ p["wa"] + p["ba"]
    val = h2 @ p["wv"] + p["bv"]
    return val + adv - jnp.mean(adv, axis=1, keepdims=True)


if __name__ == "__main__":
    # CartPole dueling DQN sizes: n_in=4 (state), n_mid=32 (hidden), n_out=2 (actions)
    n_in, n_mid, n_out = 4, 32, 2

    key = jax.random.PRNGKey(0)
    k_params, k_x1, k_x2, k_x3 = jax.random.split(key, 4)
    params = init_params(k_params, n_in, n_mid, n_out)
    slab = pack_params(params, n_in, n_mid, n_out)

    # Small CartPole-scale batch (single grid step, block == full batch dim).
    x_small = jax.random.normal(k_x1, (8, n_in), jnp.float32)
    out_small = jax.block_until_ready(dueling_net_forward(x_small, slab, n_out))
    ref_small = reference_forward(x_small, params)
    assert out_small.shape == (8, n_out), out_small.shape
    assert jnp.allclose(out_small, ref_small, atol=1e-5, rtol=1e-5), "mismatch (B=8)"

    # Single-step 256-row batch (max single-tile size for v5e/v6e).
    x_mid = jax.random.normal(k_x2, (256, n_in), jnp.float32)
    out_mid = jax.block_until_ready(dueling_net_forward(x_mid, slab, n_out))
    ref_mid = reference_forward(x_mid, params)
    assert out_mid.shape == (256, n_out), out_mid.shape
    assert jnp.allclose(out_mid, ref_mid, atol=1e-5, rtol=1e-5), "mismatch (B=256)"

    # Ragged batch > 256: exercises padding + multi-step parallel grid (megacore).
    x_big = jax.random.normal(k_x3, (300, n_in), jnp.float32)
    out_big = jax.block_until_ready(dueling_net_forward(x_big, slab, n_out))
    ref_big = reference_forward(x_big, params)
    assert out_big.shape == (300, n_out), out_big.shape
    assert jnp.allclose(out_big, ref_big, atol=1e-5, rtol=1e-5), "mismatch (B=300)"

    print("KERNEL_OK")
</pallas_src>

<mosaic_0001>
module attributes {stable_mosaic.version = 11 : i64} {
  func.func @kernel(%arg0: i32, %arg1: memref<8x4xf32, #tpu.memory_space<vmem>>, %arg2: memref<288x128xf32, #tpu.memory_space<vmem>>, %arg3: memref<8x128xf32, #tpu.memory_space<vmem>>) attributes {dimension_semantics = [#tpu.dimension_semantics<parallel>], iteration_bounds = array<i64: 1>, scalar_prefetch = 0 : i64, scratch_operands = 0 : i64, tpu.core_type = #tpu.core_type<tc>, window_params = [{transform_indices = @transform_0, window_bounds = array<i64: 8, 4>}, {pipeline_mode = #tpu.pipeline_mode<synchronous>, transform_indices = @transform_1, window_bounds = array<i64: 288, 128>}, {transform_indices = @transform_2, window_bounds = array<i64: 8, 128>}]} {
    %c0 = arith.constant 0 : index
    %c0_0 = arith.constant 0 : index
    %0 = vector.load %arg1[%c0, %c0_0] : memref<8x4xf32, #tpu.memory_space<vmem>>, vector<8x4xf32>
    %c8 = arith.constant 8 : index
    %c0_1 = arith.constant 0 : index
    %1 = vector.load %arg2[%c8, %c0_1] : memref<288x128xf32, #tpu.memory_space<vmem>>, vector<1x128xf32>
    %2 = vector.extract_strided_slice %0 {offsets = [0, 0], sizes = [8, 1], strides = [1, 1]} : vector<8x4xf32> to vector<8x1xf32>
    %c0_2 = arith.constant 0 : index
    %c0_3 = arith.constant 0 : index
    %3 = vector.load %arg2[%c0_2, %c0_3] : memref<288x128xf32, #tpu.memory_space<vmem>>, vector<1x128xf32>
    %4 = vector.broadcast %2 : vector<8x1xf32> to vector<8x128xf32>
    %5 = vector.broadcast %3 : vector<1x128xf32> to vector<8x128xf32>
    %6 = arith.mulf %4, %5 : vector<8x128xf32>
    %7 = vector.broadcast %1 : vector<1x128xf32> to vector<8x128xf32>
    %8 = arith.addf %7, %6 : vector<8x128xf32>
    %9 = vector.extract_strided_slice %0 {offsets = [0, 1], sizes = [8, 1], strides = [1, 1]} : vector<8x4xf32> to vector<8x1xf32>
    %c1 = arith.constant 1 : index
    %c0_4 = arith.constant 0 : index
    %10 = vector.load %arg2[%c1, %c0_4] : memref<288x128xf32, #tpu.memory_space<vmem>>, vector<1x128xf32>
    %11 = vector.broadcast %9 : vector<8x1xf32> to vector<8x128xf32>
    %12 = vector.broadcast %10 : vector<1x128xf32> to vector<8x128xf32>
    %13 = arith.mulf %11, %12 : vector<8x128xf32>
    %14 = arith.addf %8, %13 : vector<8x128xf32>
    %15 = vector.extract_strided_slice %0 {offsets = [0, 2], sizes = [8, 1], strides = [1, 1]} : vector<8x4xf32> to vector<8x1xf32>
    %c2 = arith.constant 2 : index
    %c0_5 = arith.constant 0 : index
    %16 = vector.load %arg2[%c2, %c0_5] : memref<288x128xf32, #tpu.memory_space<vmem>>, vector<1x128xf32>
    %17 = vector.broadcast %15 : vector<8x1xf32> to vector<8x128xf32>
    %18 = vector.broadcast %16 : vector<1x128xf32> to vector<8x128xf32>
    %19 = arith.mulf %17, %18 : vector<8x128xf32>
    %20 = arith.addf %14, %19 : vector<8x128xf32>
    %21 = vector.extract_strided_slice %0 {offsets = [0, 3], sizes = [8, 1], strides = [1, 1]} : vector<8x4xf32> to vector<8x1xf32>
    %c3 = arith.constant 3 : index
    %c0_6 = arith.constant 0 : index
    %22 = vector.load %arg2[%c3, %c0_6] : memref<288x128xf32, #tpu.memory_space<vmem>>, vector<1x128xf32>
    %23 = vector.broadcast %21 : vector<8x1xf32> to vector<8x128xf32>
    %24 = vector.broadcast %22 : vector<1x128xf32> to vector<8x128xf32>
    %25 = arith.mulf %23, %24 : vector<8x128xf32>
    %26 = arith.addf %20, %25 : vector<8x128xf32>
    %cst = arith.constant 0.000000e+00 : f32
    %27 = vector.broadcast %cst : f32 to vector<8x128xf32>
    %28 = arith.maximumf %26, %27 : vector<8x128xf32>
    %c16 = arith.constant 16 : index
    %c0_7 = arith.constant 0 : index
    %29 = vector.load %arg2[%c16, %c0_7] : memref<288x128xf32, #tpu.memory_space<vmem>>, vector<128x128xf32>
    %cst_8 = arith.constant dense<0.000000e+00> : vector<8x128xf32>
    %30 = tpu.matmul %28, %29, %cst_8 {dimension_numbers = #tpu.dot_dimension_numbers<[1], [0], [0], [1], [0, 0, 1, 1], [], []>} : vector<8x128xf32>, vector<128x128xf32>, vector<8x128xf32> -> vector<8x128xf32>
    %c144 = arith.constant 144 : index
    %c0_9 = arith.constant 0 : index
    %31 = vector.load %arg2[%c144, %c0_9] : memref<288x128xf32, #tpu.memory_space<vmem>>, vector<1x128xf32>
    %32 = vector.broadcast %31 : vector<1x128xf32> to vector<8x128xf32>
    %33 = arith.addf %30, %32 : vector<8x128xf32>
    %cst_10 = arith.constant 0.000000e+00 : f32
    %34 = vector.broadcast %cst_10 : f32 to vector<8x128xf32>
    %35 = arith.maximumf %33, %34 : vector<8x128xf32>
    %c152 = arith.constant 152 : index
    %c0_11 = arith.constant 0 : index
    %36 = vector.load %arg2[%c152, %c0_11] : memref<288x128xf32, #tpu.memory_space<vmem>>, vector<128x128xf32>
    %cst_12 = arith.constant dense<0.000000e+00> : vector<8x128xf32>
    %37 = tpu.matmul %35, %36, %cst_12 {dimension_numbers = #tpu.dot_dimension_numbers<[1], [0], [0], [1], [0, 0, 1, 1], [], []>} : vector<8x128xf32>, vector<128x128xf32>, vector<8x128xf32> -> vector<8x128xf32>
    %c280 = arith.constant 280 : index
    %c0_13 = arith.constant 0 : index
    %38 = vector.load %arg2[%c280, %c0_13] : memref<288x128xf32, #tpu.memory_space<vmem>>, vector<1x128xf32>
    %39 = vector.broadcast %38 : vector<1x128xf32> to vector<8x128xf32>
    %40 = arith.addf %37, %39 : vector<8x128xf32>
    %c0_14 = arith.constant 0 : index
    %c0_15 = arith.constant 0 : index
    %41 = vector.load %arg3[%c0_14, %c0_15] : memref<8x128xf32, #tpu.memory_space<vmem>>, vector<8x128xf32>
    tpu.vector_store %arg3[%c0_14, %c0_15], %40 {strides = array<i32>} : memref<8x128xf32, #tpu.memory_space<vmem>>, vector<8x128xf32>,
    return
  }
  func.func @transform_0(%arg0: i32) -> (i32, i32) {
    %c0_i32 = arith.constant 0 : i32
    %c0_i32_0 = arith.constant 0 : i32
    return %arg0, %c0_i32 : i32, i32
  }
  func.func @transform_1(%arg0: i32) -> (i32, i32) {
    %c0_i32 = arith.constant 0 : i32
    %c0_i32_0 = arith.constant 0 : i32
    %c0_i32_1 = arith.constant 0 : i32
    return %c0_i32, %c0_i32_0 : i32, i32
  }
  func.func @transform_2(%arg0: i32) -> (i32, i32) {
    %c0_i32 = arith.constant 0 : i32
    %c0_i32_0 = arith.constant 0 : i32
    return %arg0, %c0_i32 : i32, i32
  }
}

</mosaic_0001>

<llo_original>
// kernel: tpu_custom_call.1
$region0: #{tpu_custom_call.1}
  #allocation0 [shape = 'u32[]', space=smem, size = 0x4, offset = 0x4, fixed_abs, tag = 'smem constant byte address 0x4 - core index']
  #allocation1 [shape = 'u32[144,128]{1,0:T(1,128)}', space=vmem, size = 0x12000, scoped, tag = 'internal scratch']
  %s0 = inlined_call_operand.vmem [shape: f32[8,4], index: 0, kind: input, shape index: {}]
  %s1 = inlined_call_operand.hbm [shape: f32[288,128], index: 1, kind: input, shape index: {}]
  %s2 = inlined_call_operand.hbm [shape: f32[8,128], index: 2, kind: output, shape index: {}]
  %s3 = sld [smem:[#allocation0]]
  $region22: #{tpu_custom_call.1} parent=0
    _
  %s5 = ssub.s32 1, %s3
  %s6 = scalar_select 0, %s5, %s3
  $region1: #{tpu_custom_call.1} parent=0
    #allocation2 [shape = 'u8[147456]{0}', space=vmem, size = 0x24000, scoped, tag = 'input window, operand 1, single buffered']
    #allocation3 [shape = 's32[1]{0}', space=sflag, size = 0x4, scoped, tag = 'scoped memory for tpu_custom_call.1']
    #allocation4 [shape = 's32[1]{0}', space=sflag, size = 0x4, scoped, tag = 'scoped memory for tpu_custom_call.1']
    #allocation5 [shape = 'u8[4096]{0}', space=vmem, size = 0x1000, scoped, tag = 'output window, operand 0, single buffered']
    %7 = vsyncpa [#allocation3], 0
    %8 = vsyncpa [#allocation4], 0
    // Predicated region
    $region2: #{tpu_custom_call.1} parent=1 // pred_check
      _
    $region3: #{tpu_custom_call.1} parent=1 // pred_check_branch
      %10 = sbr.rel (0) target = $region5
    $region4: #{tpu_custom_call.1} parent=1 // pred_region
      _
    $region5: #{tpu_custom_call.1} parent=1 // pred_fallthru
      _
    // Predicated region
    $region6: #{tpu_custom_call.1} parent=1 // pred_check
      _
    $region7: #{tpu_custom_call.1} parent=1 // pred_check_branch
      %12 = sbr.rel (0) target = $region9
    $region8: #{tpu_custom_call.1} parent=1 // pred_region
      %s14 = ssub.s32 4608, 4608
      %15 = vsyncadd [#allocation3], %s14
      %s16 = sshll.u32 [#allocation2], 4
      %s17 = int_to_ptr.vmem [resolvable:$true] %s16
      %22 = dma.hbm_to_vmem [thread:$0]  %s1, 4608, %s17, [#allocation3], 128, 128, 8
    $region9: #{tpu_custom_call.1} parent=1 // pred_fallthru
      _
    // Predicated region
    $region10: #{tpu_custom_call.1} parent=1 // pred_check
      _
    $region11: #{tpu_custom_call.1} parent=1 // pred_check_branch
      %24 = sbr.rel (0) target = $region13
    $region12: #{tpu_custom_call.1} parent=1 // pred_region
      %25 = dma.done [#allocation3], 4608
    $region13: #{tpu_custom_call.1} parent=1 // pred_fallthru
      _
    %v26 = vld [vmem:[%s0] sm:$0xff]
    %v27 = vld [vmem:[#allocation2 + $0x8] sm:$0x1]
    %v28 = vld [vmem:[#allocation2] sm:$0x1]
    %30 = vset.pattern.permute.xlu0 0
    %31 = vperm.xlu0 %30, %v26
    %v32 = vpop.permute.xlu0 %31
    %v34 = vlaneseq
    %v35 = vshrl.u32 %v34, 7
    %v36 = vsub.s32 0, %v35
    %v37 = vrot.slane %v28, %v36
    %v38 = vmul.f32 %v32, %v37
    %v39 = vlaneseq
    %v40 = vshrl.u32 %v39, 7
    %v41 = vsub.s32 0, %v40
    %v42 = vrot.slane %v27, %v41
    %v43 = vadd.f32 %v42, %v38
    %v44 = vld [vmem:[#allocation2 + $0x1] sm:$0x1]
    %45 = vset.pattern.permute.xlu0 1
    %46 = vperm.xlu0 %45, %v26
    %v47 = vpop.permute.xlu0 %46
    %v49 = vlaneseq
    %v50 = vshrl.u32 %v49, 7
    %v51 = vsub.s32 0, %v50
    %v52 = vrot.slane %v44, %v51
    %v53 = vmul.f32 %v47, %v52
    %v54 = vadd.f32 %v43, %v53
    %v55 = vld [vmem:[#allocation2 + $0x2] sm:$0x1]
    %56 = vset.pattern.permute.xlu0 2
    %57 = vperm.xlu0 %56, %v26
    %v58 = vpop.permute.xlu0 %57
    %v60 = vlaneseq
    %v61 = vshrl.u32 %v60, 7
    %v62 = vsub.s32 0, %v61
    %v63 = vrot.slane %v55, %v62
    %v64 = vmul.f32 %v58, %v63
    %v65 = vadd.f32 %v54, %v64
    %v66 = vld [vmem:[#allocation2 + $0x3] sm:$0x1]
    %67 = vset.pattern.permute.xlu0 3
    %68 = vperm.xlu0 %67, %v26
    %v69 = vpop.permute.xlu0 %68
    %v71 = vlaneseq
    %v72 = vshrl.u32 %v71, 7
    %v73 = vsub.s32 0, %v72
    %v74 = vrot.slane %v66, %v73
    %v75 = vmul.f32 %v69, %v74
    %v76 = vadd.f32 %v65, %v75
    %v77 = vmax.f32 %v76, 0.0
    %v78 = vld [vmem:[#allocation2 + $0x10] sm:$0xff]
    %v79 = vld [vmem:[#allocation2 + $0x18] sm:$0xff]
    %v80 = vld [vmem:[#allocation2 + $0x20] sm:$0xff]
    %v81 = vld [vmem:[#allocation2 + $0x28] sm:$0xff]
    %v82 = vld [vmem:[#allocation2 + $0x30] sm:$0xff]
    %v83 = vld [vmem:[#allocation2 + $0x38] sm:$0xff]
    %v84 = vld [vmem:[#allocation2 + $0x40] sm:$0xff]
    %v85 = vld [vmem:[#allocation2 + $0x48] sm:$0xff]
    %v86 = vld [vmem:[#allocation2 + $0x50] sm:$0xff]
    %v87 = vld [vmem:[#allocation2 + $0x58] sm:$0xff]
    %v88 = vld [vmem:[#allocation2 + $0x60] sm:$0xff]
    %v89 = vld [vmem:[#allocation2 + $0x68] sm:$0xff]
    %v90 = vld [vmem:[#allocation2 + $0x70] sm:$0xff]
    %v91 = vld [vmem:[#allocation2 + $0x78] sm:$0xff]
    %v92 = vld [vmem:[#allocation2 + $0x80] sm:$0xff]
    %v93 = vld [vmem:[#allocation2 + $0x88] sm:$0xff]
    %v94 = vld [vmem:[#allocation2 + $0x90] sm:$0x1]
    %v95 = vlaneseq
    %v96 = vshrl.u32 %v95, 7
    %v97 = vsub.s32 0, %v96
    %v98 = vrot.slane %v94, %v97
    %99 = vmatprep.subr.mxu0 0.0
    %100 = vmatpush1.msra.mxu0 %v93
    %101 = vmatprep.subr.mxu0 0.0
    %102 = vmatpush1.msra.mxu0 %v92
    %103 = vmatprep.subr.mxu0 0.0
    %104 = vmatpush1.msra.mxu0 %v91
    %105 = vmatprep.subr.mxu0 0.0
    %106 = vmatpush1.msra.mxu0 %v90
    %107 = vmatprep.subr.mxu0 0.0
    %108 = vmatpush1.msra.mxu0 %v89
    %109 = vmatprep.subr.mxu0 0.0
    %110 = vmatpush1.msra.mxu0 %v88
    %111 = vmatprep.subr.mxu0 0.0
    %112 = vmatpush1.msra.mxu0 %v87
    %113 = vmatprep.subr.mxu0 0.0
    %114 = vmatpush1.msra.mxu0 %v86
    %115 = vmatprep.subr.mxu0 0.0
    %116 = vmatpush1.msra.mxu0 %v85
    %117 = vmatprep.subr.mxu0 0.0
    %118 = vmatpush1.msra.mxu0 %v84
    %119 = vmatprep.subr.mxu0 0.0
    %120 = vmatpush1.msra.mxu0 %v83
    %121 = vmatprep.subr.mxu0 0.0
    %122 = vmatpush1.msra.mxu0 %v82
    %123 = vmatprep.subr.mxu0 0.0
    %124 = vmatpush1.msra.mxu0 %v81
    %125 = vmatprep.subr.mxu0 0.0
    %126 = vmatpush1.msra.mxu0 %v80
    %127 = vmatprep.subr.mxu0 0.0
    %128 = vmatpush1.msra.mxu0 %v79
    %129 = vmatprep.subr.mxu0 0.0
    %130 = vmatpush1.msra.mxu0 %v78
    %131 = vmatprep.subr.mxu0 0.0
    %132 = vmatpush2.msra.mxu0 0.0
    %133 = vmatprep.subr.mxu0 0.0
    %134 = vmatpush2.msra.mxu0 0.0
    %135 = vmatprep.subr.mxu0 0.0
    %136 = vmatpush2.msra.mxu0 0.0
    %137 = vmatprep.subr.mxu0 0.0
    %138 = vmatpush2.msra.mxu0 0.0
    %139 = vmatprep.subr.mxu0 0.0
    %140 = vmatpush2.msra.mxu0 0.0
    %141 = vmatprep.subr.mxu0 0.0
    %142 = vmatpush2.msra.mxu0 0.0
    %143 = vmatprep.subr.mxu0 0.0
    %144 = vmatpush2.msra.mxu0 0.0
    %145 = vmatprep.subr.mxu0 0.0
    %146 = vmatpush2.msra.mxu0 0.0
    %147 = vmatprep.subr.mxu0 0.0
    %148 = vmatpush2.msra.mxu0 0.0
    %149 = vmatprep.subr.mxu0 0.0
    %150 = vmatpush2.msra.mxu0 0.0
    %151 = vmatprep.subr.mxu0 0.0
    %152 = vmatpush2.msra.mxu0 0.0
    %153 = vmatprep.subr.mxu0 0.0
    %154 = vmatpush2.msra.mxu0 0.0
    %155 = vmatprep.subr.mxu0 0.0
    %156 = vmatpush2.msra.mxu0 0.0
    %157 = vmatprep.subr.mxu0 0.0
    %158 = vmatpush2.msra.mxu0 0.0
    %159 = vmatprep.subr.mxu0 0.0
    %160 = vmatpush2.msra.mxu0 0.0
    %161 = vmatprep.subr.mxu0 0.0
    %162 = vmatpush2.msra.mxu0 0.0
    %163 = vmatprep.mubr.f32.mxu0 0.0
    %164 = vmatmul.mubr.f32.gmra.mxu0 %v77
    %v165 = vpop.f32.mrf.mxu0
    %v166 = vadd.f32 %v98, %v165
    %v167 = vpop.f32.mrf.mxu0
    %168 = vdwg.mxu0
    %v169 = vmax.f32 %v166, 0.0
    %v170 = vld [vmem:[#allocation2 + $0x98] sm:$0xff]
    %v171 = vld [vmem:[#allocation2 + $0xa0] sm:$0xff]
    %v172 = vld [vmem:[#allocation2 + $0xa8] sm:$0xff]
    %v173 = vld [vmem:[#allocation2 + $0xb0] sm:$0xff]
    %v174 = vld [vmem:[#allocation2 + $0xb8] sm:$0xff]
    %v175 = vld [vmem:[#allocation2 + $0xc0] sm:$0xff]
    %v176 = vld [vmem:[#allocation2 + $0xc8] sm:$0xff]
    %v177 = vld [vmem:[#allocation2 + $0xd0] sm:$0xff]
    %v178 = vld [vmem:[#allocation2 + $0xd8] sm:$0xff]
    %v179 = vld [vmem:[#allocation2 + $0xe0] sm:$0xff]
    %v180 = vld [vmem:[#allocation2 + $0xe8] sm:$0xff]
    %v181 = vld [vmem:[#allocation2 + $0xf0] sm:$0xff]
    %v182 = vld [vmem:[#allocation2 + $0xf8] sm:$0xff]
    %v183 = vld [vmem:[#allocation2 + $0x100] sm:$0xff]
    %v184 = vld [vmem:[#allocation2 + $0x108] sm:$0xff]
    %v185 = vld [vmem:[#allocation2 + $0x110] sm:$0xff]
    %v186 = vld [vmem:[#allocation2 + $0x118] sm:$0x1]
    %v187 = vlaneseq
    %v188 = vshrl.u32 %v187, 7
    %v189 = vsub.s32 0, %v188
    %v190 = vrot.slane %v186, %v189
    %191 = vmatprep.subr.mxu0 0.0
    %192 = vmatpush1.msra.mxu0 %v185
    %193 = vmatprep.subr.mxu0 0.0
    %194 = vmatpush1.msra.mxu0 %v184
    %195 = vmatprep.subr.mxu0 0.0
    %196 = vmatpush1.msra.mxu0 %v183
    %197 = vmatprep.subr.mxu0 0.0
    %198 = vmatpush1.msra.mxu0 %v182
    %199 = vmatprep.subr.mxu0 0.0
    %200 = vmatpush1.msra.mxu0 %v181
    %201 = vmatprep.subr.mxu0 0.0
    %202 = vmatpush1.msra.mxu0 %v180
    %203 = vmatprep.subr.mxu0 0.0
    %204 = vmatpush1.msra.mxu0 %v179
    %205 = vmatprep.subr.mxu0 0.0
    %206 = vmatpush1.msra.mxu0 %v178
    %207 = vmatprep.subr.mxu0 0.0
    %208 = vmatpush1.msra.mxu0 %v177
    %209 = vmatprep.subr.mxu0 0.0
    %210 = vmatpush1.msra.mxu0 %v176
    %211 = vmatprep.subr.mxu0 0.0
    %212 = vmatpush1.msra.mxu0 %v175
    %213 = vmatprep.subr.mxu0 0.0
    %214 = vmatpush1.msra.mxu0 %v174
    %215 = vmatprep.subr.mxu0 0.0
    %216 = vmatpush1.msra.mxu0 %v173
    %217 = vmatprep.subr.mxu0 0.0
    %218 = vmatpush1.msra.mxu0 %v172
    %219 = vmatprep.subr.mxu0 0.0
    %220 = vmatpush1.msra.mxu0 %v171
    %221 = vmatprep.subr.mxu0 0.0
    %222 = vmatpush1.msra.mxu0 %v170
    %223 = vmatprep.subr.mxu0 0.0
    %224 = vmatpush2.msra.mxu0 0.0
    %225 = vmatprep.subr.mxu0 0.0
    %226 = vmatpush2.msra.mxu0 0.0
    %227 = vmatprep.subr.mxu0 0.0
    %228 = vmatpush2.msra.mxu0 0.0
    %229 = vmatprep.subr.mxu0 0.0
    %230 = vmatpush2.msra.mxu0 0.0
    %231 = vmatprep.subr.mxu0 0.0
    %232 = vmatpush2.msra.mxu0 0.0
    %233 = vmatprep.subr.mxu0 0.0
    %234 = vmatpush2.msra.mxu0 0.0
    %235 = vmatprep.subr.mxu0 0.0
    %236 = vmatpush2.msra.mxu0 0.0
    %237 = vmatprep.subr.mxu0 0.0
    %238 = vmatpush2.msra.mxu0 0.0
    %239 = vmatprep.subr.mxu0 0.0
    %240 = vmatpush2.msra.mxu0 0.0
    %241 = vmatprep.subr.mxu0 0.0
    %242 = vmatpush2.msra.mxu0 0.0
    %243 = vmatprep.subr.mxu0 0.0
    %244 = vmatpush2.msra.mxu0 0.0
    %245 = vmatprep.subr.mxu0 0.0
    %246 = vmatpush2.msra.mxu0 0.0
    %247 = vmatprep.subr.mxu0 0.0
    %248 = vmatpush2.msra.mxu0 0.0
    %249 = vmatprep.subr.mxu0 0.0
    %250 = vmatpush2.msra.mxu0 0.0
    %251 = vmatprep.subr.mxu0 0.0
    %252 = vmatpush2.msra.mxu0 0.0
    %253 = vmatprep.subr.mxu0 0.0
    %254 = vmatpush2.msra.mxu0 0.0
    %255 = vmatprep.mubr.f32.mxu0 0.0
    %256 = vmatmul.mubr.f32.gmra.mxu0 %v169
    %v257 = vpop.f32.mrf.mxu0
    %v258 = vadd.f32 %v190, %v257
    %v259 = vpop.f32.mrf.mxu0
    %260 = vdwg.mxu0
    %261 = vst [vmem:[#allocation5] sm:$0xff] %v258
    // Predicated region
    $region14: #{tpu_custom_call.1} parent=1 // pred_check
      _
    $region15: #{tpu_custom_call.1} parent=1 // pred_check_branch
      %263 = sbr.rel (0) target = $region17
    $region16: #{tpu_custom_call.1} parent=1 // pred_region
      %s265 = ssub.s32 128, 128
      %266 = vsyncadd [#allocation4], %s265
      %s268 = sshll.u32 [#allocation5], 4
      %s269 = int_to_ptr.vmem [resolvable:$true] %s268
      %271 = dma.vmem_to_hbm [thread:$0]  %s269, 128, %s2, [#allocation4]
    $region17: #{tpu_custom_call.1} parent=1 // pred_fallthru
      _
    // Predicated region
    $region18: #{tpu_custom_call.1} parent=1 // pred_check
      _
    $region19: #{tpu_custom_call.1} parent=1 // pred_check_branch
      %273 = sbr.rel (0) target = $region21
    $region20: #{tpu_custom_call.1} parent=1 // pred_region
      %274 = dma.done [#allocation4], 128
    $region21: #{tpu_custom_call.1} parent=1 // pred_fallthru
      _
    %275 = vsyncpa [#allocation3], 1
    %276 = vsyncpa [#allocation4], 1

</llo_original>
